<compile_context>
chip_gen: v7x
topology: tpu7x:2x2x1
jax: 0.10.0
libtpu: 0.0.40
codegen_flags: <defaults>
</compile_context>

<pallas_src>
import functools
import math

import jax
import jax.numpy as jnp
from jax.experimental import pallas as pl
from jax.experimental.pallas import tpu as pltpu


# ----------------------------------------------------------------------------
# Planning helpers (all static Python math on shapes).
# ----------------------------------------------------------------------------
def _round_up(x, m):
    return -(-x // m) * m


def _vmem_budget():
    cap = 64 << 20                                 # conservative (v7x) fallback
    try:
        cap = int(pltpu.get_tpu_info().vmem_capacity_bytes)
    except Exception:
        pass
    # Leave headroom for Mosaic internal scratch / pipeline slack:
    #   v7x (64 MiB) -> 48 MiB budget, v5e/v6e (128 MiB) -> 100 MiB budget.
    return max(min(cap - (16 << 20), 100 << 20), 24 << 20)


def _tile_options(dim, target):
    """(tile, padded_dim) candidates, largest first.  The full dim needs no
    padding; smaller tiles are 128-aligned and require zero-padding to dim_p."""
    opts = [(dim, dim)]
    dp = _round_up(dim, 128)
    t = (min(target, dp) // 128) * 128
    while t >= 128:
        if dp % t == 0 and t < dim:
            opts.append((t, dp))
        t -= 128
    return opts


def _footprint(tb, r, wo_pad, tk, tn, in_isz, out_isz):
    x_blk = tb * (r + 1) * wo_pad * tk * in_isz
    w_blk = 2 * tk * tn * in_isz
    o_blk = tb * r * wo_pad * tn * out_isz
    acc = tb * r * wo_pad * tn * 4
    bias = tn * 4
    # double-buffered pipeline operands + resident f32 accumulator + slack
    return 2 * (x_blk + w_blk + o_blk + bias) + acc + (2 << 20)


def _plan(batch, ho, wo_pad, kdim, cout, in_isz, out_isz, tk_target, tn_target):
    budget = _vmem_budget()
    k_opts = _tile_options(kdim, tk_target)
    n_opts = _tile_options(cout, tn_target)

    nr, r, choice = 1, ho, None
    while True:
        r = -(-ho // nr)
        for tn, cout_p in n_opts:          # prefer full Cout (no input re-reads)
            for tk, kdim_p in k_opts:      # then the largest K tile that fits
                if _footprint(1, r, wo_pad, tk, tn, in_isz, out_isz) <= budget:
                    choice = (tk, kdim_p, tn, cout_p)
                    break
            if choice is not None:
                break
        if choice is not None or r == 1:
            break
        nr *= 2                            # add output-row tiling (1-row halo)

    if choice is None:                     # pathological: smallest legal tiles
        tk, kdim_p = k_opts[-1]
        tn, cout_p = n_opts[-1]
    else:
        tk, kdim_p, tn, cout_p = choice
    nn = cout_p // tn

    # Batch blocking: raise the MXU M dimension / amortize weight DMAs, but
    # keep >=2 parallel grid steps (2-TC chips) once M is already large enough.
    tb = 1
    for cand in range(2, batch + 1):
        if batch % cand:
            continue
        if cand * r * wo_pad > 2048:
            break
        if (batch // cand) * nr * nn < 2 and r * wo_pad >= 256:
            break
        if _footprint(cand, r, wo_pad, tk, tn, in_isz, out_isz) > budget:
            break
        tb = cand

    vmem_limit = int(min(max(_footprint(tb, r, wo_pad, tk, tn, in_isz, out_isz),
                             32 << 20), max(budget, 32 << 20)))
    return tb, nr, r, tk, kdim_p, tn, cout_p, vmem_limit


# ----------------------------------------------------------------------------
# Kernel: 2 H-taps over the packed (rows, 6C) layout, single f32 accumulation.
#   grid = (B/TB, NR, Cout-tiles, K-tiles)          K last, 'arbitrary'
#   x_ref  : (TB, 1, (R+1)*Wo_pad, TK)   packed input block (1-row halo built in)
#   w_ref  : (2, TK, TN)                 packed weights (tap 0: dy=0,1; tap 1: dy=2)
#   b_ref  : (1, TN)                     bias (f32)
#   o_ref  : (TB, R*Wo_pad, TN)          lane-dense channels-last output block
#   acc_ref: (TB, R*Wo_pad, TN) f32      accumulator carried across K
# ----------------------------------------------------------------------------
def _downsample_kernel(x_ref, w_ref, b_ref, o_ref, acc_ref, *, tb, rows_out, wo_pad):
    k = pl.program_id(3)
    last = pl.num_programs(3) - 1

    for bi in range(tb):
        # Two sublane-aligned ref slices (starts 0 / wo_pad are multiples of 8);
        # both taps accumulate into ONE local f32 value -> one store per K step.
        part = (
            jnp.dot(x_ref[bi, 0, 0:rows_out, :], w_ref[0],
                    preferred_element_type=jnp.float32)
            + jnp.dot(x_ref[bi, 0, wo_pad:wo_pad + rows_out, :], w_ref[1],
                      preferred_element_type=jnp.float32))

        @pl.when(k == 0)
        def _(part=part, bi=bi):           # first K step: write, no zero-fill
            acc_ref[bi] = part

        @pl.when(k != 0)
        def _(part=part, bi=bi):           # later K steps: single read-modify-write
            acc_ref[bi] = acc_ref[bi] + part

    @pl.when(k == last)
    def _():
        o_ref[...] = (acc_ref[...] + b_ref[...]).astype(o_ref.dtype)


# ----------------------------------------------------------------------------
# Hoisted parameter packing (do once per set of weights, NOT per forward call).
#   (3,3,Cin,Cout) HWIO  ->  (2, 6*Cin, Cout); tap ty covers dy = 2*ty + py,
#   packed-channel index = (py*3 + dx)*Cin + cin  (dy = 3 sub-block stays zero).
# ----------------------------------------------------------------------------
def pack_weights(weight_hwio, bias):
    kh, kw, cin, cout = weight_hwio.shape
    assert (kh, kw) == (3, 3) and cin == cout
    c = cin
    ws = jnp.zeros((2, 6 * c, cout), weight_hwio.dtype)
    for ty in range(2):
        for py in range(2):
            dy = 2 * ty + py
            if dy >= 3:
                continue
            for dx in range(3):
                off = (py * 3 + dx) * c
                ws = ws.at[ty, off:off + c, :].set(weight_hwio[dy, dx])
    return ws, bias.reshape(1, cout).astype(jnp.float32)


# ----------------------------------------------------------------------------
# Wrapper: NCHW in / NCHW out, PyTorch `Downsample` semantics.
# ----------------------------------------------------------------------------
def downsample(x_nchw, w_packed, bias, *, compute_dtype=None,
               tk_target=512, tn_target=512):
    b, c, h, w = x_nchw.shape
    cout = c
    kdim = 6 * c
    assert w_packed.shape == (2, kdim, cout)

    ho = (h - 2) // 2 + 1                      # F.pad [0,1,0,1] + conv3x3 s2
    wo = (w - 2) // 2 + 1
    wo_pad = _round_up(wo, 8)                  # sublane-aligned taps / flatten

    in_dtype = x_nchw.dtype if compute_dtype is None else compute_dtype
    out_dtype = x_nchw.dtype

    tb, nr, r, tk, kdim_p, tn, cout_p, vmem_limit = _plan(
        b, ho, wo_pad, kdim, cout,
        jnp.dtype(in_dtype).itemsize, jnp.dtype(out_dtype).itemsize,
        tk_target, tn_target)
    ho_pad = nr * r
    rows_in = (r + 1) * wo_pad
    rows_out = r * wo_pad

    # ---- glue: NCHW -> NHWC, zero pad, H space-to-depth + W im2col (6C) ----
    x = jnp.transpose(x_nchw, (0, 2, 3, 1))                       # (B,H,W,C)
    hp = 2 * (ho_pad + 1)
    wp = 2 * wo_pad + 1
    xp = jnp.pad(x, ((0, 0), (0, hp - h), (0, wp - w), (0, 0)))
    xh = xp.reshape(b, ho_pad + 1, 2, wp, c)                      # (B,R+,py,Wp,C)
    cols = [xh[:, :, :, dx: dx + 2 * wo_pad: 2, :] for dx in range(3)]
    xs = jnp.stack(cols, axis=3)                                  # (B,R+,py,dx,Wop,C)
    xs = jnp.transpose(xs, (0, 1, 4, 2, 3, 5))                    # (B,R+,Wop,py,dx,C)
    xs = xs.reshape(b, ho_pad + 1, wo_pad, kdim)

    # Output-row blocks with a 1-row halo (duplicated in HBM only when nr > 1).
    if nr == 1:
        xs = xs.reshape(b, 1, rows_in, kdim)
    else:
        xs = jnp.stack([xs[:, rb * r: rb * r + r + 1] for rb in range(nr)], axis=1)
        xs = xs.reshape(b, nr, rows_in, kdim)

    ws, bs = w_packed, bias.reshape(1, cout).astype(jnp.float32)
    if kdim_p != kdim or cout_p != cout:       # channel pad to 128-aligned tiles
        xs = jnp.pad(xs, ((0, 0), (0, 0), (0, 0), (0, kdim_p - kdim)))
        ws = jnp.pad(ws, ((0, 0), (0, kdim_p - kdim), (0, cout_p - cout)))
        bs = jnp.pad(bs, ((0, 0), (0, cout_p - cout)))
    xs = xs.astype(in_dtype)
    ws = ws.astype(in_dtype)

    grid = (b // tb, nr, cout_p // tn, kdim_p // tk)
    # NOTE: if profiling shows exposed weight DMA at very small M, add
    # pipeline_mode=pl.Buffered(3) on the weight BlockSpec.
    out = pl.pallas_call(
        functools.partial(_downsample_kernel, tb=tb, rows_out=rows_out,
                          wo_pad=wo_pad),
        out_shape=jax.ShapeDtypeStruct((b, ho_pad * wo_pad, cout_p), out_dtype),
        grid_spec=pltpu.PrefetchScalarGridSpec(
            num_scalar_prefetch=0,
            grid=grid,
            in_specs=[
                pl.BlockSpec((tb, 1, rows_in, tk),
                             lambda bi, ri, ni, ki: (bi, ri, 0, ki)),
                pl.BlockSpec((2, tk, tn),
                             lambda bi, ri, ni, ki: (0, ki, ni)),
                pl.BlockSpec((1, tn),
                             lambda bi, ri, ni, ki: (0, ni)),
            ],
            out_specs=pl.BlockSpec((tb, rows_out, tn),
                                   lambda bi, ri, ni, ki: (bi, ri, ni)),
            scratch_shapes=[pltpu.VMEM((tb, rows_out, tn), jnp.float32)],
        ),
        compiler_params=pltpu.CompilerParams(
            dimension_semantics=("parallel", "parallel", "parallel", "arbitrary"),
            vmem_limit_bytes=vmem_limit,
        ),
    )(xs, ws, bs)

    out = out.reshape(b, ho_pad, wo_pad, cout_p)[:, :ho, :wo, :cout]
    return jnp.transpose(out, (0, 3, 1, 2))                       # back to NCHW


# ----------------------------------------------------------------------------
# Parameters: variance_scaling(scale=1, fan_avg, uniform) conv weight, zero
# bias, matching the PyTorch conv2d() helper.  Weight stored HWIO.
# ----------------------------------------------------------------------------
def init_params(key, channel):
    fan_in = channel * 9
    fan_out = channel * 9
    bound = math.sqrt(3.0 / ((fan_in + fan_out) / 2.0))
    w = jax.random.uniform(key, (3, 3, channel, channel), jnp.float32, -bound, bound)
    b = jnp.zeros((channel,), jnp.float32)
    return {"w": w, "b": b}


# Pure-JAX reference (XLA conv) for correctness checking.
def _reference(x_nchw, weight_hwio, bias):
    xp = jnp.pad(x_nchw, ((0, 0), (0, 0), (0, 1), (0, 1)))
    out = jax.lax.conv_general_dilated(
        xp, weight_hwio, window_strides=(2, 2), padding="VALID",
        dimension_numbers=("NCHW", "HWIO", "NCHW"),
        precision=jax.lax.Precision.HIGHEST)
    return out + bias.reshape(1, -1, 1, 1)


if __name__ == "__main__":
    B, C, H, W = 2, 4, 16, 16
    key = jax.random.PRNGKey(0)
    kx, kp = jax.random.split(key)

    x = jax.random.normal(kx, (B, C, H, W), jnp.float32)
    params = init_params(kp, C)

    # Weight repack / bias reshape hoisted out of the per-call forward.
    w_packed, bias_row = pack_weights(params["w"], params["b"])

    fwd = jax.jit(downsample)
    out = fwd(x, w_packed, bias_row)
    out = jax.block_until_ready(out)

    assert out.shape == (B, C, H // 2, W // 2) and out.dtype == jnp.float32
    ref = _reference(x, params["w"], params["b"])
    max_err = float(jnp.max(jnp.abs(out - ref)))
    assert jnp.allclose(out, ref, atol=1e-5, rtol=1e-5), max_err
    print("KERNEL_OK")
</pallas_src>

<mosaic_0001>
module attributes {stable_mosaic.version = 11 : i64} {
  func.func @_downsample_kernel(%arg0: i32, %arg1: i32, %arg2: i32, %arg3: i32, %arg4: memref<2x1x72x24xf32, #tpu.memory_space<vmem>>, %arg5: memref<2x24x4xf32, #tpu.memory_space<vmem>>, %arg6: memref<1x4xf32, #tpu.memory_space<vmem>>, %arg7: memref<2x64x4xf32, #tpu.memory_space<vmem>>, %arg8: memref<2x64x4xf32, #tpu.memory_space<vmem>>) attributes {dimension_semantics = [#tpu.dimension_semantics<parallel>, #tpu.dimension_semantics<parallel>, #tpu.dimension_semantics<parallel>, #tpu.dimension_semantics<arbitrary>], iteration_bounds = array<i64: 1, 1, 1, 1>, scalar_prefetch = 0 : i64, scratch_operands = 1 : i64, tpu.core_type = #tpu.core_type<tc>, window_params = [{transform_indices = @transform_0, window_bounds = array<i64: 2, 1, 72, 24>}, {transform_indices = @transform_1, window_bounds = array<i64: 2, 24, 4>}, {transform_indices = @transform_2, window_bounds = array<i64: 1, 4>}, {transform_indices = @transform_3, window_bounds = array<i64: 2, 64, 4>}]} {
    %c0 = arith.constant 0 : index
    %c0_0 = arith.constant 0 : index
    %c0_1 = arith.constant 0 : index
    %c0_2 = arith.constant 0 : index
    %0 = vector.load %arg4[%c0, %c0_0, %c0_1, %c0_2] : memref<2x1x72x24xf32, #tpu.memory_space<vmem>>, vector<1x1x64x24xf32>
    %1 = vector.shape_cast %0 : vector<1x1x64x24xf32> to vector<64x24xf32>
    %c0_3 = arith.constant 0 : index
    %c0_4 = arith.constant 0 : index
    %c0_5 = arith.constant 0 : index
    %2 = vector.load %arg5[%c0_3, %c0_4, %c0_5] : memref<2x24x4xf32, #tpu.memory_space<vmem>>, vector<1x24x4xf32>
    %3 = vector.shape_cast %2 : vector<1x24x4xf32> to vector<24x4xf32>
    %cst = arith.constant dense<0.000000e+00> : vector<64x4xf32>
    %4 = tpu.matmul %1, %3, %cst {dimension_numbers = #tpu.dot_dimension_numbers<[1], [0], [0], [1], [0, 0, 1, 1], [], []>} : vector<64x24xf32>, vector<24x4xf32>, vector<64x4xf32> -> vector<64x4xf32>
    %c0_6 = arith.constant 0 : index
    %c0_7 = arith.constant 0 : index
    %c8 = arith.constant 8 : index
    %c0_8 = arith.constant 0 : index
    %5 = vector.load %arg4[%c0_6, %c0_7, %c8, %c0_8] : memref<2x1x72x24xf32, #tpu.memory_space<vmem>>, vector<1x1x64x24xf32>
    %6 = vector.shape_cast %5 : vector<1x1x64x24xf32> to vector<64x24xf32>
    %c1 = arith.constant 1 : index
    %c0_9 = arith.constant 0 : index
    %c0_10 = arith.constant 0 : index
    %7 = vector.load %arg5[%c1, %c0_9, %c0_10] : memref<2x24x4xf32, #tpu.memory_space<vmem>>, vector<1x24x4xf32>
    %8 = vector.shape_cast %7 : vector<1x24x4xf32> to vector<24x4xf32>
    %cst_11 = arith.constant dense<0.000000e+00> : vector<64x4xf32>
    %9 = tpu.matmul %6, %8, %cst_11 {dimension_numbers = #tpu.dot_dimension_numbers<[1], [0], [0], [1], [0, 0, 1, 1], [], []>} : vector<64x24xf32>, vector<24x4xf32>, vector<64x4xf32> -> vector<64x4xf32>
    %10 = arith.addf %4, %9 : vector<64x4xf32>
    %c0_i32 = arith.constant 0 : i32
    %11 = arith.cmpi eq, %arg3, %c0_i32 : i32
    %12 = arith.extui %11 : i1 to i32
    %c0_i32_12 = arith.constant 0 : i32
    %13 = arith.cmpi ne, %12, %c0_i32_12 : i32
    scf.if %13 {
      %c0_37 = arith.constant 0 : index
      %c0_38 = arith.constant 0 : index
      %c0_39 = arith.constant 0 : index
      %37 = vector.load %arg8[%c0_37, %c0_38, %c0_39] : memref<2x64x4xf32, #tpu.memory_space<vmem>>, vector<1x64x4xf32>
      %38 = vector.shape_cast %37 : vector<1x64x4xf32> to vector<64x4xf32>
      %39 = vector.shape_cast %10 : vector<64x4xf32> to vector<1x64x4xf32>
      tpu.vector_store %arg8[%c0_37, %c0_38, %c0_39], %39 {strides = array<i32>} : memref<2x64x4xf32, #tpu.memory_space<vmem>>, vector<1x64x4xf32>,
    } else {
    }
    %c0_i32_13 = arith.constant 0 : i32
    %14 = arith.cmpi ne, %arg3, %c0_i32_13 : i32
    %15 = arith.extui %14 : i1 to i32
    %c0_i32_14 = arith.constant 0 : i32
    %16 = arith.cmpi ne, %15, %c0_i32_14 : i32
    scf.if %16 {
      %c0_37 = arith.constant 0 : index
      %c0_38 = arith.constant 0 : index
      %c0_39 = arith.constant 0 : index
      %37 = vector.load %arg8[%c0_37, %c0_38, %c0_39] : memref<2x64x4xf32, #tpu.memory_space<vmem>>, vector<1x64x4xf32>
      %38 = vector.shape_cast %37 : vector<1x64x4xf32> to vector<64x4xf32>
      %39 = arith.addf %38, %10 : vector<64x4xf32>
      %c0_40 = arith.constant 0 : index
      %c0_41 = arith.constant 0 : index
      %c0_42 = arith.constant 0 : index
      %40 = vector.load %arg8[%c0_40, %c0_41, %c0_42] : memref<2x64x4xf32, #tpu.memory_space<vmem>>, vector<1x64x4xf32>
      %41 = vector.shape_cast %40 : vector<1x64x4xf32> to vector<64x4xf32>
      %42 = vector.shape_cast %39 : vector<64x4xf32> to vector<1x64x4xf32>
      tpu.vector_store %arg8[%c0_40, %c0_41, %c0_42], %42 {strides = array<i32>} : memref<2x64x4xf32, #tpu.memory_space<vmem>>, vector<1x64x4xf32>,
    } else {
    }
    %c1_15 = arith.constant 1 : index
    %c0_16 = arith.constant 0 : index
    %c0_17 = arith.constant 0 : index
    %c0_18 = arith.constant 0 : index
    %17 = vector.load %arg4[%c1_15, %c0_16, %c0_17, %c0_18] : memref<2x1x72x24xf32, #tpu.memory_space<vmem>>, vector<1x1x64x24xf32>
    %18 = vector.shape_cast %17 : vector<1x1x64x24xf32> to vector<64x24xf32>
    %c0_19 = arith.constant 0 : index
    %c0_20 = arith.constant 0 : index
    %c0_21 = arith.constant 0 : index
    %19 = vector.load %arg5[%c0_19, %c0_20, %c0_21] : memref<2x24x4xf32, #tpu.memory_space<vmem>>, vector<1x24x4xf32>
    %20 = vector.shape_cast %19 : vector<1x24x4xf32> to vector<24x4xf32>
    %cst_22 = arith.constant dense<0.000000e+00> : vector<64x4xf32>
    %21 = tpu.matmul %18, %20, %cst_22 {dimension_numbers = #tpu.dot_dimension_numbers<[1], [0], [0], [1], [0, 0, 1, 1], [], []>} : vector<64x24xf32>, vector<24x4xf32>, vector<64x4xf32> -> vector<64x4xf32>
    %c1_23 = arith.constant 1 : index
    %c0_24 = arith.constant 0 : index
    %c8_25 = arith.constant 8 : index
    %c0_26 = arith.constant 0 : index
    %22 = vector.load %arg4[%c1_23, %c0_24, %c8_25, %c0_26] : memref<2x1x72x24xf32, #tpu.memory_space<vmem>>, vector<1x1x64x24xf32>
    %23 = vector.shape_cast %22 : vector<1x1x64x24xf32> to vector<64x24xf32>
    %c1_27 = arith.constant 1 : index
    %c0_28 = arith.constant 0 : index
    %c0_29 = arith.constant 0 : index
    %24 = vector.load %arg5[%c1_27, %c0_28, %c0_29] : memref<2x24x4xf32, #tpu.memory_space<vmem>>, vector<1x24x4xf32>
    %25 = vector.shape_cast %24 : vector<1x24x4xf32> to vector<24x4xf32>
    %cst_30 = arith.constant dense<0.000000e+00> : vector<64x4xf32>
    %26 = tpu.matmul %23, %25, %cst_30 {dimension_numbers = #tpu.dot_dimension_numbers<[1], [0], [0], [1], [0, 0, 1, 1], [], []>} : vector<64x24xf32>, vector<24x4xf32>, vector<64x4xf32> -> vector<64x4xf32>
    %27 = arith.addf %21, %26 : vector<64x4xf32>
    %c0_i32_31 = arith.constant 0 : i32
    %28 = arith.cmpi eq, %arg3, %c0_i32_31 : i32
    %29 = arith.extui %28 : i1 to i32
    %c0_i32_32 = arith.constant 0 : i32
    %30 = arith.cmpi ne, %29, %c0_i32_32 : i32
    scf.if %30 {
      %c1_37 = arith.constant 1 : index
      %c0_38 = arith.constant 0 : index
      %c0_39 = arith.constant 0 : index
      %37 = vector.load %arg8[%c1_37, %c0_38, %c0_39] : memref<2x64x4xf32, #tpu.memory_space<vmem>>, vector<1x64x4xf32>
      %38 = vector.shape_cast %37 : vector<1x64x4xf32> to vector<64x4xf32>
      %39 = vector.shape_cast %27 : vector<64x4xf32> to vector<1x64x4xf32>
      tpu.vector_store %arg8[%c1_37, %c0_38, %c0_39], %39 {strides = array<i32>} : memref<2x64x4xf32, #tpu.memory_space<vmem>>, vector<1x64x4xf32>,
    } else {
    }
    %c0_i32_33 = arith.constant 0 : i32
    %31 = arith.cmpi ne, %arg3, %c0_i32_33 : i32
    %32 = arith.extui %31 : i1 to i32
    %c0_i32_34 = arith.constant 0 : i32
    %33 = arith.cmpi ne, %32, %c0_i32_34 : i32
    scf.if %33 {
      %c1_37 = arith.constant 1 : index
      %c0_38 = arith.constant 0 : index
      %c0_39 = arith.constant 0 : index
      %37 = vector.load %arg8[%c1_37, %c0_38, %c0_39] : memref<2x64x4xf32, #tpu.memory_space<vmem>>, vector<1x64x4xf32>
      %38 = vector.shape_cast %37 : vector<1x64x4xf32> to vector<64x4xf32>
      %39 = arith.addf %38, %27 : vector<64x4xf32>
      %c1_40 = arith.constant 1 : index
      %c0_41 = arith.constant 0 : index
      %c0_42 = arith.constant 0 : index
      %40 = vector.load %arg8[%c1_40, %c0_41, %c0_42] : memref<2x64x4xf32, #tpu.memory_space<vmem>>, vector<1x64x4xf32>
      %41 = vector.shape_cast %40 : vector<1x64x4xf32> to vector<64x4xf32>
      %42 = vector.shape_cast %39 : vector<64x4xf32> to vector<1x64x4xf32>
      tpu.vector_store %arg8[%c1_40, %c0_41, %c0_42], %42 {strides = array<i32>} : memref<2x64x4xf32, #tpu.memory_space<vmem>>, vector<1x64x4xf32>,
    } else {
    }
    %c0_i32_35 = arith.constant 0 : i32
    %34 = arith.cmpi eq, %arg3, %c0_i32_35 : i32
    %35 = arith.extui %34 : i1 to i32
    %c0_i32_36 = arith.constant 0 : i32
    %36 = arith.cmpi ne, %35, %c0_i32_36 : i32
    scf.if %36 {
      %c0_37 = arith.constant 0 : index
      %c0_38 = arith.constant 0 : index
      %c0_39 = arith.constant 0 : index
      %37 = vector.load %arg8[%c0_37, %c0_38, %c0_39] : memref<2x64x4xf32, #tpu.memory_space<vmem>>, vector<2x64x4xf32>
      %c0_40 = arith.constant 0 : index
      %c0_41 = arith.constant 0 : index
      %38 = vector.load %arg6[%c0_40, %c0_41] : memref<1x4xf32, #tpu.memory_space<vmem>>, vector<1x4xf32>
      %39 = vector.shape_cast %38 : vector<1x4xf32> to vector<1x1x4xf32>
      %40 = vector.broadcast %39 : vector<1x1x4xf32> to vector<2x64x4xf32>
      %41 = arith.addf %37, %40 : vector<2x64x4xf32>
      %c0_42 = arith.constant 0 : index
      %c0_43 = arith.constant 0 : index
      %c0_44 = arith.constant 0 : index
      %42 = vector.load %arg7[%c0_42, %c0_43, %c0_44] : memref<2x64x4xf32, #tpu.memory_space<vmem>>, vector<2x64x4xf32>
      tpu.vector_store %arg7[%c0_42, %c0_43, %c0_44], %41 {strides = array<i32>} : memref<2x64x4xf32, #tpu.memory_space<vmem>>, vector<2x64x4xf32>,
    } else {
    }
    return
  }
  func.func @transform_0(%arg0: i32, %arg1: i32, %arg2: i32, %arg3: i32) -> (i32, i32, i32, i32) {
    %c0_i32 = arith.constant 0 : i32
    %c0_i32_0 = arith.constant 0 : i32
    return %arg0, %arg1, %c0_i32, %arg3 : i32, i32, i32, i32
  }
  func.func @transform_1(%arg0: i32, %arg1: i32, %arg2: i32, %arg3: i32) -> (i32, i32, i32) {
    %c0_i32 = arith.constant 0 : i32
    %c0_i32_0 = arith.constant 0 : i32
    return %c0_i32, %arg3, %arg2 : i32, i32, i32
  }
  func.func @transform_2(%arg0: i32, %arg1: i32, %arg2: i32, %arg3: i32) -> (i32, i32) {
    %c0_i32 = arith.constant 0 : i32
    %c0_i32_0 = arith.constant 0 : i32
    return %c0_i32, %arg2 : i32, i32
  }
  func.func @transform_3(%arg0: i32, %arg1: i32, %arg2: i32, %arg3: i32) -> (i32, i32, i32) {
    %c0_i32 = arith.constant 0 : i32
    return %arg0, %arg1, %arg2 : i32, i32, i32
  }
}

</mosaic_0001>

<llo_original>
// kernel: downsample.1
$region0: #{downsample.1}
  #allocation0 [shape = 'u32[]', space=smem, size = 0x4, offset = 0x4, fixed_abs, tag = 'smem constant byte address 0x4 - core index']
  #allocation1 [shape = 'u32[144,128]{1,0:T(1,128)}', space=vmem, size = 0x12000, scoped, tag = 'internal scratch']
  #allocation2 [shape = 'f32[2,64,4]{2,1,0:T(8,128)}', space=vmem, size = 0x10000, scoped, tag = 'scratch operand']
  %s0 = inlined_call_operand.vmem [shape: f32[2,1,72,24], index: 0, kind: input, shape index: {}]
  %s1 = inlined_call_operand.vmem [shape: f32[2,24,4], index: 1, kind: input, shape index: {}]
  %s2 = inlined_call_operand.vmem [shape: f32[1,4], index: 2, kind: input, shape index: {}]
  %s3 = inlined_call_operand.vmem [shape: f32[2,64,4], index: 3, kind: output, shape index: {}]
  %s4 = sld [smem:[#allocation0]]
  $region42: #{downsample.1} parent=0
    _
  %s6 = ssub.s32 1, %s4
  %s7 = scalar_select 0, %s6, %s4
  // Predicated region
  $region2: #{downsample.1} parent=0 // pred_check
    _
  $region3: #{downsample.1} parent=0 // pred_check_branch
    %9 = sbr.rel (0) target = $region5
  $region4: #{downsample.1} parent=0 // pred_region
    _
  $region5: #{downsample.1} parent=0 // pred_fallthru
    _
  // Predicated region
  $region6: #{downsample.1} parent=0 // pred_check
    _
  $region7: #{downsample.1} parent=0 // pred_check_branch
    %11 = sbr.rel (0) target = $region9
  $region8: #{downsample.1} parent=0 // pred_region
    _
  $region9: #{downsample.1} parent=0 // pred_fallthru
    _
  // Predicated region
  $region10: #{downsample.1} parent=0 // pred_check
    _
  $region11: #{downsample.1} parent=0 // pred_check_branch
    %13 = sbr.rel (0) target = $region13
  $region12: #{downsample.1} parent=0 // pred_region
    _
  $region13: #{downsample.1} parent=0 // pred_fallthru
    _
  %v14 = vld [vmem:[%s0] sm:$0xff]
  %v15 = vld [vmem:[%s0 + $0x8] sm:$0xff]
  %v16 = vld [vmem:[%s0 + $0x10] sm:$0xff]
  %v17 = vld [vmem:[%s0 + $0x18] sm:$0xff]
  %v18 = vld [vmem:[%s0 + $0x20] sm:$0xff]
  %v19 = vld [vmem:[%s0 + $0x28] sm:$0xff]
  %v20 = vld [vmem:[%s0 + $0x30] sm:$0xff]
  %v21 = vld [vmem:[%s0 + $0x38] sm:$0xff]
  %v22 = vld [vmem:[%s1] sm:$0xff]
  %v23 = vld [vmem:[%s1 + $0x8] sm:$0xff]
  %v24 = vld [vmem:[%s1 + $0x10] sm:$0xff]
  %v25 = vld [vmem:[%s0 + $0x40] sm:$0xff]
  %s26 = scalar_lea.vmem %s1, 24
  %v27 = vld [vmem:[%s26] sm:$0xff]
  %v28 = vld [vmem:[%s26 + $0x8] sm:$0xff]
  %v29 = vld [vmem:[%s26 + $0x10] sm:$0xff]
  %vm30 = vcmask 195584
  %v32 = vsel %vm30, %v15, 0
  %v35 = vsel %vm30, %v16, 0
  %v38 = vsel %vm30, %v17, 0
  %v41 = vsel %vm30, %v18, 0
  %v44 = vsel %vm30, %v19, 0
  %v47 = vsel %vm30, %v20, 0
  %v50 = vsel %vm30, %v21, 0
  %v53 = vsel %vm30, %v25, 0
  %55 = vmatprep.subr.mxu0 0.0
  %56 = vmatpush1.msra.mxu0 %v27
  %57 = vmatprep.subr.mxu0 0.0
  %58 = vmatpush1.msra.mxu0 %v28
  %59 = vmatprep.subr.mxu0 0.0
  %60 = vmatpush1.msra.mxu0 %v29
  %61 = vmatprep.subr.mxu0 0.0
  %62 = vmatpush1.msra.mxu0 0.0
  %63 = vmatprep.subr.mxu0 0.0
  %64 = vmatpush1.msra.mxu0 0.0
  %65 = vmatprep.subr.mxu0 0.0
  %66 = vmatpush1.msra.mxu0 0.0
  %67 = vmatprep.subr.mxu0 0.0
  %68 = vmatpush1.msra.mxu0 0.0
  %69 = vmatprep.subr.mxu0 0.0
  %70 = vmatpush1.msra.mxu0 0.0
  %71 = vmatprep.subr.mxu0 0.0
  %72 = vmatpush1.msra.mxu0 0.0
  %73 = vmatprep.subr.mxu0 0.0
  %74 = vmatpush1.msra.mxu0 0.0
  %75 = vmatprep.subr.mxu0 0.0
  %76 = vmatpush1.msra.mxu0 0.0
  %77 = vmatprep.subr.mxu0 0.0
  %78 = vmatpush1.msra.mxu0 0.0
  %79 = vmatprep.subr.mxu0 0.0
  %80 = vmatpush1.msra.mxu0 0.0
  %81 = vmatprep.subr.mxu0 0.0
  %82 = vmatpush1.msra.mxu0 0.0
  %83 = vmatprep.subr.mxu0 0.0
  %84 = vmatpush1.msra.mxu0 0.0
  %85 = vmatprep.subr.mxu0 0.0
  %86 = vmatpush1.msra.mxu0 0.0
  %87 = vmatprep.subr.mxu0 0.0
  %88 = vmatpush1.msra.mxu0 0.0
  %89 = vmatprep.subr.mxu0 0.0
  %90 = vmatpush1.msra.mxu0 0.0
  %91 = vmatprep.subr.mxu0 0.0
  %92 = vmatpush1.msra.mxu0 0.0
  %93 = vmatprep.subr.mxu0 0.0
  %94 = vmatpush1.msra.mxu0 0.0
  %95 = vmatprep.subr.mxu0 0.0
  %96 = vmatpush1.msra.mxu0 0.0
  %97 = vmatprep.subr.mxu0 0.0
  %98 = vmatpush1.msra.mxu0 0.0
  %99 = vmatprep.subr.mxu0 0.0
  %100 = vmatpush1.msra.mxu0 0.0
  %101 = vmatprep.subr.mxu0 0.0
  %102 = vmatpush1.msra.mxu0 0.0
  %103 = vmatprep.subr.mxu0 0.0
  %104 = vmatpush1.msra.mxu0 0.0
  %105 = vmatprep.subr.mxu0 0.0
  %106 = vmatpush1.msra.mxu0 0.0
  %107 = vmatprep.subr.mxu0 0.0
  %108 = vmatpush1.msra.mxu0 0.0
  %109 = vmatprep.subr.mxu0 0.0
  %110 = vmatpush1.msra.mxu0 0.0
  %111 = vmatprep.subr.mxu0 0.0
  %112 = vmatpush1.msra.mxu0 0.0
  %113 = vmatprep.subr.mxu0 0.0
  %114 = vmatpush1.msra.mxu0 0.0
  %115 = vmatprep.subr.mxu0 0.0
  %116 = vmatpush1.msra.mxu0 0.0
  %117 = vmatprep.subr.mxu0 0.0
  %118 = vmatpush1.msra.mxu0 0.0
  %119 = vmatprep.mubr.f32.mxu0 0.0
  %120 = vmatmul.mubr.f32.gmra.mrb[0].mxu0 %v32
  %v121 = vpop.f32.mrb[0].mxu0
  %v122 = vadd.f32 0.0, %v121
  %v123 = vpop.f32.mrb[0].mxu0
  %124 = vmatprep.mubr.f32.mxu0 0.0
  %125 = vmatmul.mubr.f32.gmra.mrb[0].mxu0 %v35
  %v126 = vpop.f32.mrb[0].mxu0
  %v127 = vadd.f32 0.0, %v126
  %v128 = vpop.f32.mrb[0].mxu0
  %129 = vmatprep.mubr.f32.mxu0 0.0
  %130 = vmatmul.mubr.f32.gmra.mrb[0].mxu0 %v38
  %v131 = vpop.f32.mrb[0].mxu0
  %v132 = vadd.f32 0.0, %v131
  %v133 = vpop.f32.mrb[0].mxu0
  %134 = vmatprep.mubr.f32.mxu0 0.0
  %135 = vmatmul.mubr.f32.gmra.mrb[0].mxu0 %v41
  %v136 = vpop.f32.mrb[0].mxu0
  %v137 = vadd.f32 0.0, %v136
  %v138 = vpop.f32.mrb[0].mxu0
  %139 = vmatprep.mubr.f32.mxu0 0.0
  %140 = vmatmul.mubr.f32.gmra.mrb[0].mxu0 %v44
  %v141 = vpop.f32.mrb[0].mxu0
  %v142 = vadd.f32 0.0, %v141
  %v143 = vpop.f32.mrb[0].mxu0
  %144 = vmatprep.mubr.f32.mxu0 0.0
  %145 = vmatmul.mubr.f32.gmra.mrb[0].mxu0 %v47
  %v146 = vpop.f32.mrb[0].mxu0
  %v147 = vadd.f32 0.0, %v146
  %v148 = vpop.f32.mrb[0].mxu0
  %149 = vmatprep.mubr.f32.mxu0 0.0
  %150 = vmatmul.mubr.f32.gmra.mrb[0].mxu0 %v50
  %v151 = vpop.f32.mrb[0].mxu0
  %v152 = vadd.f32 0.0, %v151
  %v153 = vpop.f32.mrb[0].mxu0
  %154 = vmatprep.mubr.f32.mxu0 0.0
  %155 = vmatmul.mubr.f32.gmra.mrb[0].mxu0 %v53
  %v156 = vpop.f32.mrb[0].mxu0
  %v157 = vadd.f32 0.0, %v156
  %v158 = vpop.f32.mrb[0].mxu0
  %159 = vdwg.mxu0
  %v161 = vsel %vm30, %v14, 0
  %163 = vmatprep.subr.mxu0 0.0
  %164 = vmatpush1.msra.mxu0 %v22
  %165 = vmatprep.subr.mxu0 0.0
  %166 = vmatpush1.msra.mxu0 %v23
  %167 = vmatprep.subr.mxu0 0.0
  %168 = vmatpush1.msra.mxu0 %v24
  %169 = vmatprep.subr.mxu0 0.0
  %170 = vmatpush1.msra.mxu0 0.0
  %171 = vmatprep.subr.mxu0 0.0
  %172 = vmatpush1.msra.mxu0 0.0
  %173 = vmatprep.subr.mxu0 0.0
  %174 = vmatpush1.msra.mxu0 0.0
  %175 = vmatprep.subr.mxu0 0.0
  %176 = vmatpush1.msra.mxu0 0.0
  %177 = vmatprep.subr.mxu0 0.0
  %178 = vmatpush1.msra.mxu0 0.0
  %179 = vmatprep.subr.mxu0 0.0
  %180 = vmatpush1.msra.mxu0 0.0
  %181 = vmatprep.subr.mxu0 0.0
  %182 = vmatpush1.msra.mxu0 0.0
  %183 = vmatprep.subr.mxu0 0.0
  %184 = vmatpush1.msra.mxu0 0.0
  %185 = vmatprep.subr.mxu0 0.0
  %186 = vmatpush1.msra.mxu0 0.0
  %187 = vmatprep.subr.mxu0 0.0
  %188 = vmatpush1.msra.mxu0 0.0
  %189 = vmatprep.subr.mxu0 0.0
  %190 = vmatpush1.msra.mxu0 0.0
  %191 = vmatprep.subr.mxu0 0.0
  %192 = vmatpush1.msra.mxu0 0.0
  %193 = vmatprep.subr.mxu0 0.0
  %194 = vmatpush1.msra.mxu0 0.0
  %195 = vmatprep.subr.mxu0 0.0
  %196 = vmatpush1.msra.mxu0 0.0
  %197 = vmatprep.subr.mxu0 0.0
  %198 = vmatpush1.msra.mxu0 0.0
  %199 = vmatprep.subr.mxu0 0.0
  %200 = vmatpush1.msra.mxu0 0.0
  %201 = vmatprep.subr.mxu0 0.0
  %202 = vmatpush1.msra.mxu0 0.0
  %203 = vmatprep.subr.mxu0 0.0
  %204 = vmatpush1.msra.mxu0 0.0
  %205 = vmatprep.subr.mxu0 0.0
  %206 = vmatpush1.msra.mxu0 0.0
  %207 = vmatprep.subr.mxu0 0.0
  %208 = vmatpush1.msra.mxu0 0.0
  %209 = vmatprep.subr.mxu0 0.0
  %210 = vmatpush1.msra.mxu0 0.0
  %211 = vmatprep.subr.mxu0 0.0
  %212 = vmatpush1.msra.mxu0 0.0
  %213 = vmatprep.subr.mxu0 0.0
  %214 = vmatpush1.msra.mxu0 0.0
  %215 = vmatprep.subr.mxu0 0.0
  %216 = vmatpush1.msra.mxu0 0.0
  %217 = vmatprep.subr.mxu0 0.0
  %218 = vmatpush1.msra.mxu0 0.0
  %219 = vmatprep.subr.mxu0 0.0
  %220 = vmatpush1.msra.mxu0 0.0
  %221 = vmatprep.subr.mxu0 0.0
  %222 = vmatpush1.msra.mxu0 0.0
  %223 = vmatprep.subr.mxu0 0.0
  %224 = vmatpush1.msra.mxu0 0.0
  %225 = vmatprep.subr.mxu0 0.0
  %226 = vmatpush1.msra.mxu0 0.0
  %227 = vmatprep.mubr.f32.mxu0 0.0
  %228 = vmatmul.mubr.f32.gmra.mrb[0].mxu0 %v161
  %v229 = vpop.f32.mrb[0].mxu0
  %v230 = vadd.f32 %v122, %v229
  %v231 = vpop.f32.mrb[0].mxu0
  %232 = vmatprep.mubr.f32.mxu0 0.0
  %233 = vmatmul.mubr.f32.gmra.mrb[0].mxu0 %v32
  %v234 = vpop.f32.mrb[0].mxu0
  %v235 = vadd.f32 %v127, %v234
  %v236 = vpop.f32.mrb[0].mxu0
  %237 = vmatprep.mubr.f32.mxu0 0.0
  %238 = vmatmul.mubr.f32.gmra.mrb[0].mxu0 %v35
  %v239 = vpop.f32.mrb[0].mxu0
  %v240 = vadd.f32 %v132, %v239
  %v241 = vpop.f32.mrb[0].mxu0
  %242 = vmatprep.mubr.f32.mxu0 0.0
  %243 = vmatmul.mubr.f32.gmra.mrb[0].mxu0 %v38
  %v244 = vpop.f32.mrb[0].mxu0
  %v245 = vadd.f32 %v137, %v244
  %v246 = vpop.f32.mrb[0].mxu0
  %247 = vmatprep.mubr.f32.mxu0 0.0
  %248 = vmatmul.mubr.f32.gmra.mrb[0].mxu0 %v41
  %v249 = vpop.f32.mrb[0].mxu0
  %v250 = vadd.f32 %v142, %v249
  %v251 = vpop.f32.mrb[0].mxu0
  %252 = vmatprep.mubr.f32.mxu0 0.0
  %253 = vmatmul.mubr.f32.gmra.mrb[0].mxu0 %v44
  %v254 = vpop.f32.mrb[0].mxu0
  %v255 = vadd.f32 %v147, %v254
  %v256 = vpop.f32.mrb[0].mxu0
  %257 = vmatprep.mubr.f32.mxu0 0.0
  %258 = vmatmul.mubr.f32.gmra.mrb[0].mxu0 %v47
  %v259 = vpop.f32.mrb[0].mxu0
  %v260 = vadd.f32 %v152, %v259
  %v261 = vpop.f32.mrb[0].mxu0
  %262 = vmatprep.mubr.f32.mxu0 0.0
  %263 = vmatmul.mubr.f32.gmra.mrb[0].mxu0 %v50
  %v264 = vpop.f32.mrb[0].mxu0
  %v265 = vadd.f32 %v157, %v264
  %v266 = vpop.f32.mrb[0].mxu0
  %267 = vdwg.mxu0
  %p268 = scmp.eq.s32.totalorder 0, 0
  // Predicated region
  $region14: #{downsample.1} parent=0 // pred_check
    %p269 = pneg %p268
  $region15: #{downsample.1} parent=0 // pred_check_branch
    %271 = sbr.rel (%p269) target = $region17
  $region16: #{downsample.1} parent=0 // pred_region
    %vm272 = vcmask 31744
    %273 = vst.msk [vmem:[#allocation2] sm:$0xff] %vm272, %v230
    %274 = vst.msk [vmem:[#allocation2 + $0x8] sm:$0xff] %vm272, %v235
    %275 = vst.msk [vmem:[#allocation2 + $0x10] sm:$0xff] %vm272, %v240
    %276 = vst.msk [vmem:[#allocation2 + $0x18] sm:$0xff] %vm272, %v245
    %277 = vst.msk [vmem:[#allocation2 + $0x20] sm:$0xff] %vm272, %v250
    %278 = vst.msk [vmem:[#allocation2 + $0x28] sm:$0xff] %vm272, %v255
    %279 = vst.msk [vmem:[#allocation2 + $0x30] sm:$0xff] %vm272, %v260
    %280 = vst.msk [vmem:[#allocation2 + $0x38] sm:$0xff] %vm272, %v265
  $region17: #{downsample.1} parent=0 // pred_fallthru
    _
  %p281 = scmp.ne.s32.totalorder 0, 0
  // Predicated region
  $region18: #{downsample.1} parent=0 // pred_check
    %p282 = pneg %p281
  $region19: #{downsample.1} parent=0 // pred_check_branch
    %284 = sbr.rel (%p282) target = $region21
  $region20: #{downsample.1} parent=0 // pred_region
    %v285 = vld [vmem:[#allocation2] sm:$0xff]
    %v286 = vld [vmem:[#allocation2 + $0x8] sm:$0xff]
    %v287 = vld [vmem:[#allocation2 + $0x10] sm:$0xff]
    %v288 = vld [vmem:[#allocation2 + $0x18] sm:$0xff]
    %v289 = vld [vmem:[#allocation2 + $0x20] sm:$0xff]
    %v290 = vld [vmem:[#allocation2 + $0x28] sm:$0xff]
    %v291 = vld [vmem:[#allocation2 + $0x30] sm:$0xff]
    %v292 = vld [vmem:[#allocation2 + $0x38] sm:$0xff]
    %v293 = vadd.f32 %v285, %v230
    %v294 = vadd.f32 %v286, %v235
    %v295 = vadd.f32 %v287, %v240
    %v296 = vadd.f32 %v288, %v245
    %v297 = vadd.f32 %v289, %v250
    %v298 = vadd.f32 %v290, %v255
    %v299 = vadd.f32 %v291, %v260
    %v300 = vadd.f32 %v292, %v265
    %vm301 = vcmask 31744
    %302 = vst.msk [vmem:[#allocation2] sm:$0xff] %vm301, %v293
    %303 = vst.msk [vmem:[#allocation2 + $0x8] sm:$0xff] %vm301, %v294
    %304 = vst.msk [vmem:[#allocation2 + $0x10] sm:$0xff] %vm301, %v295
    %305 = vst.msk [vmem:[#allocation2 + $0x18] sm:$0xff] %vm301, %v296
    %306 = vst.msk [vmem:[#allocation2 + $0x20] sm:$0xff] %vm301, %v297
    %307 = vst.msk [vmem:[#allocation2 + $0x28] sm:$0xff] %vm301, %v298
    %308 = vst.msk [vmem:[#allocation2 + $0x30] sm:$0xff] %vm301, %v299
    %309 = vst.msk [vmem:[#allocation2 + $0x38] sm:$0xff] %vm301, %v300
  $region21: #{downsample.1} parent=0 // pred_fallthru
    _
  %s310 = scalar_lea.vmem %s0, 72
  %v311 = vld [vmem:[%s310] sm:$0xff]
  %v312 = vld [vmem:[%s310 + $0x8] sm:$0xff]
  %v313 = vld [vmem:[%s310 + $0x10] sm:$0xff]
  %v314 = vld [vmem:[%s310 + $0x18] sm:$0xff]
  %v315 = vld [vmem:[%s310 + $0x20] sm:$0xff]
  %v316 = vld [vmem:[%s310 + $0x28] sm:$0xff]
  %v317 = vld [vmem:[%s310 + $0x30] sm:$0xff]
  %v318 = vld [vmem:[%s310 + $0x38] sm:$0xff]
  %v319 = vld [vmem:[%s1] sm:$0xff]
  %v320 = vld [vmem:[%s1 + $0x8] sm:$0xff]
  %v321 = vld [vmem:[%s1 + $0x10] sm:$0xff]
  %v322 = vld [vmem:[%s310 + $0x40] sm:$0xff]
  %v323 = vld [vmem:[%s26] sm:$0xff]
  %v324 = vld [vmem:[%s26 + $0x8] sm:$0xff]
  %v325 = vld [vmem:[%s26 + $0x10] sm:$0xff]
  %v327 = vsel %vm30, %v312, 0
  %v330 = vsel %vm30, %v313, 0
  %v333 = vsel %vm30, %v314, 0
  %v336 = vsel %vm30, %v315, 0
  %v339 = vsel %vm30, %v316, 0
  %v342 = vsel %vm30, %v317, 0
  %v345 = vsel %vm30, %v318, 0
  %v348 = vsel %vm30, %v322, 0
  %350 = vmatprep.subr.mxu0 0.0
  %351 = vmatpush1.msra.mxu0 %v323
  %352 = vmatprep.subr.mxu0 0.0
  %353 = vmatpush1.msra.mxu0 %v324
  %354 = vmatprep.subr.mxu0 0.0
  %355 = vmatpush1.msra.mxu0 %v325
  %356 = vmatprep.subr.mxu0 0.0
  %357 = vmatpush1.msra.mxu0 0.0
  %358 = vmatprep.subr.mxu0 0.0
  %359 = vmatpush1.msra.mxu0 0.0
  %360 = vmatprep.subr.mxu0 0.0
  %361 = vmatpush1.msra.mxu0 0.0
  %362 = vmatprep.subr.mxu0 0.0
  %363 = vmatpush1.msra.mxu0 0.0
  %364 = vmatprep.subr.mxu0 0.0
  %365 = vmatpush1.msra.mxu0 0.0
  %366 = vmatprep.subr.mxu0 0.0
  %367 = vmatpush1.msra.mxu0 0.0
  %368 = vmatprep.subr.mxu0 0.0
  %369 = vmatpush1.msra.mxu0 0.0
  %370 = vmatprep.subr.mxu0 0.0
  %371 = vmatpush1.msra.mxu0 0.0
  %372 = vmatprep.subr.mxu0 0.0
  %373 = vmatpush1.msra.mxu0 0.0
  %374 = vmatprep.subr.mxu0 0.0
  %375 = vmatpush1.msra.mxu0 0.0
  %376 = vmatprep.subr.mxu0 0.0
  %377 = vmatpush1.msra.mxu0 0.0
  %378 = vmatprep.subr.mxu0 0.0
  %379 = vmatpush1.msra.mxu0 0.0
  %380 = vmatprep.subr.mxu0 0.0
  %381 = vmatpush1.msra.mxu0 0.0
  %382 = vmatprep.subr.mxu0 0.0
  %383 = vmatpush1.msra.mxu0 0.0
  %384 = vmatprep.subr.mxu0 0.0
  %385 = vmatpush1.msra.mxu0 0.0
  %386 = vmatprep.subr.mxu0 0.0
  %387 = vmatpush1.msra.mxu0 0.0
  %388 = vmatprep.subr.mxu0 0.0
  %389 = vmatpush1.msra.mxu0 0.0
  %390 = vmatprep.subr.mxu0 0.0
  %391 = vmatpush1.msra.mxu0 0.0
  %392 = vmatprep.subr.mxu0 0.0
  %393 = vmatpush1.msra.mxu0 0.0
  %394 = vmatprep.subr.mxu0 0.0
  %395 = vmatpush1.msra.mxu0 0.0
  %396 = vmatprep.subr.mxu0 0.0
  %397 = vmatpush1.msra.mxu0 0.0
  %398 = vmatprep.subr.mxu0 0.0
  %399 = vmatpush1.msra.mxu0 0.0
  %400 = vmatprep.subr.mxu0 0.0
  %401 = vmatpush1.msra.mxu0 0.0
  %402 = vmatprep.subr.mxu0 0.0
  %403 = vmatpush1.msra.mxu0 0.0
  %404 = vmatprep.subr.mxu0 0.0
  %405 = vmatpush1.msra.mxu0 0.0
  %406 = vmatprep.subr.mxu0 0.0
  %407 = vmatpush1.msra.mxu0 0.0
  %408 = vmatprep.subr.mxu0 0.0
  %409 = vmatpush1.msra.mxu0 0.0
  %410 = vmatprep.subr.mxu0 0.0
  %411 = vmatpush1.msra.mxu0 0.0
  %412 = vmatprep.subr.mxu0 0.0
  %413 = vmatpush1.msra.mxu0 0.0
  %414 = vmatprep.mubr.f32.mxu0 0.0
  %415 = vmatmul.mubr.f32.gmra.mrb[0].mxu0 %v327
  %v416 = vpop.f32.mrb[0].mxu0
  %v417 = vadd.f32 0.0, %v416
  %v418 = vpop.f32.mrb[0].mxu0
  %419 = vmatprep.mubr.f32.mxu0 0.0
  %420 = vmatmul.mubr.f32.gmra.mrb[0].mxu0 %v330
  %v421 = vpop.f32.mrb[0].mxu0
  %v422 = vadd.f32 0.0, %v421
  %v423 = vpop.f32.mrb[0].mxu0
  %424 = vmatprep.mubr.f32.mxu0 0.0
  %425 = vmatmul.mubr.f32.gmra.mrb[0].mxu0 %v333
  %v426 = vpop.f32.mrb[0].mxu0
  %v427 = vadd.f32 0.0, %v426
  %v428 = vpop.f32.mrb[0].mxu0
  %429 = vmatprep.mubr.f32.mxu0 0.0
  %430 = vmatmul.mubr.f32.gmra.mrb[0].mxu0 %v336
  %v431 = vpop.f32.mrb[0].mxu0
  %v432 = vadd.f32 0.0, %v431
  %v433 = vpop.f32.mrb[0].mxu0
  %434 = vmatprep.mubr.f32.mxu0 0.0
  %435 = vmatmul.mubr.f32.gmra.mrb[0].mxu0 %v339
  %v436 = vpop.f32.mrb[0].mxu0
  %v437 = vadd.f32 0.0, %v436
  %v438 = vpop.f32.mrb[0].mxu0
  %439 = vmatprep.mubr.f32.mxu0 0.0
  %440 = vmatmul.mubr.f32.gmra.mrb[0].mxu0 %v342
  %v441 = vpop.f32.mrb[0].mxu0
  %v442 = vadd.f32 0.0, %v441
  %v443 = vpop.f32.mrb[0].mxu0
  %444 = vmatprep.mubr.f32.mxu0 0.0
  %445 = vmatmul.mubr.f32.gmra.mrb[0].mxu0 %v345
  %v446 = vpop.f32.mrb[0].mxu0
  %v447 = vadd.f32 0.0, %v446
  %v448 = vpop.f32.mrb[0].mxu0
  %449 = vmatprep.mubr.f32.mxu0 0.0
  %450 = vmatmul.mubr.f32.gmra.mrb[0].mxu0 %v348
  %v451 = vpop.f32.mrb[0].mxu0
  %v452 = vadd.f32 0.0, %v451
  %v453 = vpop.f32.mrb[0].mxu0
  %454 = vdwg.mxu0
  %v456 = vsel %vm30, %v311, 0
  %458 = vmatprep.subr.mxu0 0.0
  %459 = vmatpush1.msra.mxu0 %v319
  %460 = vmatprep.subr.mxu0 0.0
  %461 = vmatpush1.msra.mxu0 %v320
  %462 = vmatprep.subr.mxu0 0.0
  %463 = vmatpush1.msra.mxu0 %v321
  %464 = vmatprep.subr.mxu0 0.0
  %465 = vmatpush1.msra.mxu0 0.0
  %466 = vmatprep.subr.mxu0 0.0
  %467 = vmatpush1.msra.mxu0 0.0
  %468 = vmatprep.subr.mxu0 0.0
  %469 = vmatpush1.msra.mxu0 0.0
  %470 = vmatprep.subr.mxu0 0.0
  %471 = vmatpush1.msra.mxu0 0.0
  %472 = vmatprep.subr.mxu0 0.0
  %473 = vmatpush1.msra.mxu0 0.0
  %474 = vmatprep.subr.mxu0 0.0
  %475 = vmatpush1.msra.mxu0 0.0
  %476 = vmatprep.subr.mxu0 0.0
  %477 = vmatpush1.msra.mxu0 0.0
  %478 = vmatprep.subr.mxu0 0.0
  %479 = vmatpush1.msra.mxu0 0.0
  %480 = vmatprep.subr.mxu0 0.0
  %481 = vmatpush1.msra.mxu0 0.0
  %482 = vmatprep.subr.mxu0 0.0
  %483 = vmatpush1.msra.mxu0 0.0
  %484 = vmatprep.subr.mxu0 0.0
  %485 = vmatpush1.msra.mxu0 0.0
  %486 = vmatprep.subr.mxu0 0.0
  %487 = vmatpush1.msra.mxu0 0.0
  %488 = vmatprep.subr.mxu0 0.0
  %489 = vmatpush1.msra.mxu0 0.0
  %490 = vmatprep.subr.mxu0 0.0
  %491 = vmatpush1.msra.mxu0 0.0
  %492 = vmatprep.subr.mxu0 0.0
  %493 = vmatpush1.msra.mxu0 0.0
  %494 = vmatprep.subr.mxu0 0.0
  %495 = vmatpush1.msra.mxu0 0.0
  %496 = vmatprep.subr.mxu0 0.0
  %497 = vmatpush1.msra.mxu0 0.0
  %498 = vmatprep.subr.mxu0 0.0
  %499 = vmatpush1.msra.mxu0 0.0
  %500 = vmatprep.subr.mxu0 0.0
  %501 = vmatpush1.msra.mxu0 0.0
  %502 = vmatprep.subr.mxu0 0.0
  %503 = vmatpush1.msra.mxu0 0.0
  %504 = vmatprep.subr.mxu0 0.0
  %505 = vmatpush1.msra.mxu0 0.0
  %506 = vmatprep.subr.mxu0 0.0
  %507 = vmatpush1.msra.mxu0 0.0
  %508 = vmatprep.subr.mxu0 0.0
  %509 = vmatpush1.msra.mxu0 0.0
  %510 = vmatprep.subr.mxu0 0.0
  %511 = vmatpush1.msra.mxu0 0.0
  %512 = vmatprep.subr.mxu0 0.0
  %513 = vmatpush1.msra.mxu0 0.0
  %514 = vmatprep.subr.mxu0 0.0
  %515 = vmatpush1.msra.mxu0 0.0
  %516 = vmatprep.subr.mxu0 0.0
  %517 = vmatpush1.msra.mxu0 0.0
  %518 = vmatprep.subr.mxu0 0.0
  %519 = vmatpush1.msra.mxu0 0.0
  %520 = vmatprep.subr.mxu0 0.0
  %521 = vmatpush1.msra.mxu0 0.0
  %522 = vmatprep.mubr.f32.mxu0 0.0
  %523 = vmatmul.mubr.f32.gmra.mrb[0].mxu0 %v456
  %v524 = vpop.f32.mrb[0].mxu0
  %v525 = vadd.f32 %v417, %v524
  %v526 = vpop.f32.mrb[0].mxu0
  %527 = vmatprep.mubr.f32.mxu0 0.0
  %528 = vmatmul.mubr.f32.gmra.mrb[0].mxu0 %v327
  %v529 = vpop.f32.mrb[0].mxu0
  %v530 = vadd.f32 %v422, %v529
  %v531 = vpop.f32.mrb[0].mxu0
  %532 = vmatprep.mubr.f32.mxu0 0.0
  %533 = vmatmul.mubr.f32.gmra.mrb[0].mxu0 %v330
  %v534 = vpop.f32.mrb[0].mxu0
  %v535 = vadd.f32 %v427, %v534
  %v536 = vpop.f32.mrb[0].mxu0
  %537 = vmatprep.mubr.f32.mxu0 0.0
  %538 = vmatmul.mubr.f32.gmra.mrb[0].mxu0 %v333
  %v539 = vpop.f32.mrb[0].mxu0
  %v540 = vadd.f32 %v432, %v539
  %v541 = vpop.f32.mrb[0].mxu0
  %542 = vmatprep.mubr.f32.mxu0 0.0
  %543 = vmatmul.mubr.f32.gmra.mrb[0].mxu0 %v336
  %v544 = vpop.f32.mrb[0].mxu0
  %v545 = vadd.f32 %v437, %v544
  %v546 = vpop.f32.mrb[0].mxu0
  %547 = vmatprep.mubr.f32.mxu0 0.0
  %548 = vmatmul.mubr.f32.gmra.mrb[0].mxu0 %v339
  %v549 = vpop.f32.mrb[0].mxu0
  %v550 = vadd.f32 %v442, %v549
  %v551 = vpop.f32.mrb[0].mxu0
  %552 = vmatprep.mubr.f32.mxu0 0.0
  %553 = vmatmul.mubr.f32.gmra.mrb[0].mxu0 %v342
  %v554 = vpop.f32.mrb[0].mxu0
  %v555 = vadd.f32 %v447, %v554
  %v556 = vpop.f32.mrb[0].mxu0
  %557 = vmatprep.mubr.f32.mxu0 0.0
  %558 = vmatmul.mubr.f32.gmra.mrb[0].mxu0 %v345
  %v559 = vpop.f32.mrb[0].mxu0
  %v560 = vadd.f32 %v452, %v559
  %v561 = vpop.f32.mrb[0].mxu0
  %562 = vdwg.mxu0
  // Predicated region
  $region22: #{downsample.1} parent=0 // pred_check
    %p563 = pneg %p268
  $region23: #{downsample.1} parent=0 // pred_check_branch
    %565 = sbr.rel (%p563) target = $region25
  $region24: #{downsample.1} parent=0 // pred_region
    %s566 = scalar_lea.vmem [#allocation2], 64
    %vm567 = vcmask 31744
    %568 = vst.msk [vmem:[%s566] sm:$0xff] %vm567, %v525
    %569 = vst.msk [vmem:[%s566 + $0x8] sm:$0xff] %vm567, %v530
    %570 = vst.msk [vmem:[%s566 + $0x10] sm:$0xff] %vm567, %v535
    %571 = vst.msk [vmem:[%s566 + $0x18] sm:$0xff] %vm567, %v540
    %572 = vst.msk [vmem:[%s566 + $0x20] sm:$0xff] %vm567, %v545
    %573 = vst.msk [vmem:[%s566 + $0x28] sm:$0xff] %vm567, %v550
    %574 = vst.msk [vmem:[%s566 + $0x30] sm:$0xff] %vm567, %v555
    %575 = vst.msk [vmem:[%s566 + $0x38] sm:$0xff] %vm567, %v560
  $region25: #{downsample.1} parent=0 // pred_fallthru
    _
  // Predicated region
  $region26: #{downsample.1} parent=0 // pred_check
    %p576 = pneg %p281
  $region27: #{downsample.1} parent=0 // pred_check_branch
    %578 = sbr.rel (%p576) target = $region29
  $region28: #{downsample.1} parent=0 // pred_region
    %s579 = scalar_lea.vmem [#allocation2], 64
    %v580 = vld [vmem:[%s579] sm:$0xff]
    %v581 = vld [vmem:[%s579 + $0x8] sm:$0xff]
    %v582 = vld [vmem:[%s579 + $0x10] sm:$0xff]
    %v583 = vld [vmem:[%s579 + $0x18] sm:$0xff]
    %v584 = vld [vmem:[%s579 + $0x20] sm:$0xff]
    %v585 = vld [vmem:[%s579 + $0x28] sm:$0xff]
    %v586 = vld [vmem:[%s579 + $0x30] sm:$0xff]
    %v587 = vld [vmem:[%s579 + $0x38] sm:$0xff]
    %v588 = vadd.f32 %v580, %v525
    %v589 = vadd.f32 %v581, %v530
    %v590 = vadd.f32 %v582, %v535
    %v591 = vadd.f32 %v583, %v540
    %v592 = vadd.f32 %v584, %v545
    %v593 = vadd.f32 %v585, %v550
    %v594 = vadd.f32 %v586, %v555
    %v595 = vadd.f32 %v587, %v560
    %vm596 = vcmask 31744
    %597 = vst.msk [vmem:[%s579] sm:$0xff] %vm596, %v588
    %598 = vst.msk [vmem:[%s579 + $0x8] sm:$0xff] %vm596, %v589
    %599 = vst.msk [vmem:[%s579 + $0x10] sm:$0xff] %vm596, %v590
    %600 = vst.msk [vmem:[%s579 + $0x18] sm:$0xff] %vm596, %v591
    %601 = vst.msk [vmem:[%s579 + $0x20] sm:$0xff] %vm596, %v592
    %602 = vst.msk [vmem:[%s579 + $0x28] sm:$0xff] %vm596, %v593
    %603 = vst.msk [vmem:[%s579 + $0x30] sm:$0xff] %vm596, %v594
    %604 = vst.msk [vmem:[%s579 + $0x38] sm:$0xff] %vm596, %v595
  $region29: #{downsample.1} parent=0 // pred_fallthru
    _
  // Predicated region
  $region30: #{downsample.1} parent=0 // pred_check
    %p605 = pneg %p268
  $region31: #{downsample.1} parent=0 // pred_check_branch
    %607 = sbr.rel (%p605) target = $region33
  $region32: #{downsample.1} parent=0 // pred_region
    %v608 = vld [vmem:[#allocation2] sm:$0xff]
    %v609 = vld [vmem:[#allocation2 + $0x8] sm:$0xff]
    %v610 = vld [vmem:[#allocation2 + $0x10] sm:$0xff]
    %v611 = vld [vmem:[#allocation2 + $0x18] sm:$0xff]
    %v612 = vld [vmem:[#allocation2 + $0x20] sm:$0xff]
    %v613 = vld [vmem:[#allocation2 + $0x28] sm:$0xff]
    %v614 = vld [vmem:[#allocation2 + $0x30] sm:$0xff]
    %v615 = vld [vmem:[#allocation2 + $0x38] sm:$0xff]
    %v616 = vld [vmem:[#allocation2 + $0x40] sm:$0xff]
    %v617 = vld [vmem:[#allocation2 + $0x48] sm:$0xff]
    %v618 = vld [vmem:[#allocation2 + $0x50] sm:$0xff]
    %v619 = vld [vmem:[#allocation2 + $0x58] sm:$0xff]
    %v620 = vld [vmem:[#allocation2 + $0x60] sm:$0xff]
    %v621 = vld [vmem:[#allocation2 + $0x68] sm:$0xff]
    %v622 = vld [vmem:[#allocation2 + $0x70] sm:$0xff]
    %v623 = vld [vmem:[#allocation2 + $0x78] sm:$0xff]
    %v624 = vld [vmem:[%s2] sm:$0x1]
    %v626 = vlaneseq
    %v627 = vshrl.u32 %v626, 7
    %v628 = vsub.s32 0, %v627
    %v629 = vrot.slane %v624, %v628
    %v631 = vadd.f32 %v608, %v629
    %v632 = vadd.f32 %v609, %v629
    %v633 = vadd.f32 %v610, %v629
    %v634 = vadd.f32 %v611, %v629
    %v635 = vadd.f32 %v612, %v629
    %v636 = vadd.f32 %v613, %v629
    %v637 = vadd.f32 %v614, %v629
    %v638 = vadd.f32 %v615, %v629
    %v639 = vadd.f32 %v616, %v629
    %v640 = vadd.f32 %v617, %v629
    %v641 = vadd.f32 %v618, %v629
    %v642 = vadd.f32 %v619, %v629
    %v643 = vadd.f32 %v620, %v629
    %v644 = vadd.f32 %v621, %v629
    %v645 = vadd.f32 %v622, %v629
    %v646 = vadd.f32 %v623, %v629
    %vm647 = vcmask 31744
    %648 = vst.msk [vmem:[%s3] sm:$0xff] %vm647, %v631
    %649 = vst.msk [vmem:[%s3 + $0x8] sm:$0xff] %vm647, %v632
    %650 = vst.msk [vmem:[%s3 + $0x10] sm:$0xff] %vm647, %v633
    %651 = vst.msk [vmem:[%s3 + $0x18] sm:$0xff] %vm647, %v634
    %652 = vst.msk [vmem:[%s3 + $0x20] sm:$0xff] %vm647, %v635
    %653 = vst.msk [vmem:[%s3 + $0x28] sm:$0xff] %vm647, %v636
    %654 = vst.msk [vmem:[%s3 + $0x30] sm:$0xff] %vm647, %v637
    %655 = vst.msk [vmem:[%s3 + $0x38] sm:$0xff] %vm647, %v638
    %656 = vst.msk [vmem:[%s3 + $0x40] sm:$0xff] %vm647, %v639
    %657 = vst.msk [vmem:[%s3 + $0x48] sm:$0xff] %vm647, %v640
    %658 = vst.msk [vmem:[%s3 + $0x50] sm:$0xff] %vm647, %v641
    %659 = vst.msk [vmem:[%s3 + $0x58] sm:$0xff] %vm647, %v642
    %660 = vst.msk [vmem:[%s3 + $0x60] sm:$0xff] %vm647, %v643
    %661 = vst.msk [vmem:[%s3 + $0x68] sm:$0xff] %vm647, %v644
    %662 = vst.msk [vmem:[%s3 + $0x70] sm:$0xff] %vm647, %v645
    %663 = vst.msk [vmem:[%s3 + $0x78] sm:$0xff] %vm647, %v646
  $region33: #{downsample.1} parent=0 // pred_fallthru
    _
  // Predicated region
  $region34: #{downsample.1} parent=0 // pred_check
    _
  $region35: #{downsample.1} parent=0 // pred_check_branch
    %665 = sbr.rel (0) target = $region37
  $region36: #{downsample.1} parent=0 // pred_region
    _
  $region37: #{downsample.1} parent=0 // pred_fallthru
    _
  // Predicated region
  $region38: #{downsample.1} parent=0 // pred_check
    _
  $region39: #{downsample.1} parent=0 // pred_check_branch
    %667 = sbr.rel (0) target = $region41
  $region40: #{downsample.1} parent=0 // pred_region
    _
  $region41: #{downsample.1} parent=0 // pred_fallthru
    _

</llo_original>
